<compile_context>
chip_gen: v5e
topology: v5e:2x2
jax: 0.10.0
libtpu: 0.0.40
codegen_flags: <defaults>
</compile_context>

<pallas_src>
import jax
import jax.numpy as jnp
from jax.experimental import pallas as pl
from jax.experimental.pallas import tpu as pltpu

IN_F, HID_F, OUT_F = 10, 10, 5

IN_PAD = 16     # K of first matmul: in-features padded to a sublane-tile multiple (>= 10)
HID_PAD = 128   # hidden width padded to full lane width (bias + ReLU stay full-lane VPU)
OUT_PAD = 8     # output lanes: smallest convenient width >= 5 -> 16x less writeback vs 128

TM_CAP = 1024          # rows per grid step cap (well under VMEM on all generations)
SPLIT_MIN_ROWS = 512   # above this, force >= 2 grid steps so v7x's 2 TCs both get work


def _round_up(n, m):
    return ((n + m - 1) // m) * m


def toy_mp_kernel(x_ref, w1t_ref, b1_ref, w2t_ref, b2_ref, o_ref):
    # x: (TM, 16) param_dtype; w1t: (16, 128) param_dtype; b1: (1, 128) f32
    # w2t: (128, 8) param_dtype; b2: (1, 8) f32; o: (TM, 8) f32
    h = jnp.dot(x_ref[...], w1t_ref[...], preferred_element_type=jnp.float32)
    h = jnp.maximum(h + b1_ref[...], 0.0)           # bias + ReLU in f32 (VPU)
    h = h.astype(w2t_ref.dtype)                     # back to MXU input dtype
    y = jnp.dot(h, w2t_ref[...], preferred_element_type=jnp.float32) + b2_ref[...]
    o_ref[...] = y.astype(o_ref.dtype)


def prepare_params(w1, b1, w2, b2, param_dtype=jnp.bfloat16):
    """One-time (init) prep: transpose + zero-pad to the byte-lean MXU layout.

    w1: (10, 10), b1: (10,), w2: (5, 10), b2: (5,)   [PyTorch nn.Linear convention]
    Zero padding is mathematically inert (ReLU(0)=0, zero weight rows/cols add nothing).
    """
    w1t = jnp.zeros((IN_PAD, HID_PAD), jnp.float32).at[:IN_F, :HID_F].set(w1.T)
    w2t = jnp.zeros((HID_PAD, OUT_PAD), jnp.float32).at[:HID_F, :OUT_F].set(w2.T)
    b1p = jnp.zeros((1, HID_PAD), jnp.float32).at[0, :HID_F].set(b1)
    b2p = jnp.zeros((1, OUT_PAD), jnp.float32).at[0, :OUT_F].set(b2)
    return (w1t.astype(param_dtype), b1p, w2t.astype(param_dtype), b2p)


@jax.jit
def toy_mp_forward(x, w1t_p, b1_p, w2t_p, b2_p):
    """x: (B, 10) f32; prepared params from prepare_params(). Returns (B, 5) f32."""
    B, in_f = x.shape
    param_dtype = w1t_p.dtype

    # dtype-native sublane multiple (packed-vreg friendly for bf16 x / output tiles)
    sub = 16 if param_dtype == jnp.bfloat16 else 8
    rows = _round_up(B, sub)
    TM = min(TM_CAP, rows)
    if rows >= SPLIT_MIN_ROWS:
        # v7x: guarantee >= 2 grid steps so both TensorCores get batch tiles.
        TM = min(TM, _round_up(rows // 2, sub))
    B_pad = _round_up(B, TM)

    # Row pad to the grid, lane pad only 10 -> 16 (not 128): cheap, and inert math-wise.
    xp = jnp.pad(x.astype(param_dtype), ((0, B_pad - B), (0, IN_PAD - in_f)))

    cost = pl.CostEstimate(
        flops=2 * B * (IN_F * HID_F + HID_F * OUT_F),
        transcendentals=0,
        bytes_accessed=(
            xp.size * xp.dtype.itemsize
            + w1t_p.size * w1t_p.dtype.itemsize
            + b1_p.size * 4
            + w2t_p.size * w2t_p.dtype.itemsize
            + b2_p.size * 4
            + B_pad * OUT_PAD * 4
        ),
    )

    out_padded = pl.pallas_call(
        toy_mp_kernel,
        out_shape=jax.ShapeDtypeStruct((B_pad, OUT_PAD), jnp.float32),
        grid=(B_pad // TM,),
        in_specs=[
            pl.BlockSpec((TM, IN_PAD), lambda i: (i, 0)),       # x tile per batch block
            pl.BlockSpec((IN_PAD, HID_PAD), lambda i: (0, 0)),  # w1^T (replicated, small)
            pl.BlockSpec((1, HID_PAD), lambda i: (0, 0)),       # b1   (replicated)
            pl.BlockSpec((HID_PAD, OUT_PAD), lambda i: (0, 0)), # w2^T (replicated, small)
            pl.BlockSpec((1, OUT_PAD), lambda i: (0, 0)),       # b2   (replicated)
        ],
        out_specs=pl.BlockSpec((TM, OUT_PAD), lambda i: (i, 0)),
        compiler_params=pltpu.CompilerParams(
            dimension_semantics=("parallel",),  # megacore split of batch tiles on v7x
        ),
        cost_estimate=cost,
    )(xp, w1t_p, b1_p, w2t_p, b2_p)

    # Padded batch rows are ReLU(b1)@W2^T + b2, NOT zero -> row slice is mandatory.
    return out_padded[:B, :OUT_F]


if __name__ == "__main__":
    key = jax.random.PRNGKey(0)
    k_x, k_w1, k_b1, k_w2, k_b2, k_x2 = jax.random.split(key, 6)

    B = 8  # small batch

    # Deterministic parameter init (PyTorch-style uniform bounds, synthetic values).
    bound1 = 1.0 / jnp.sqrt(IN_F)
    bound2 = 1.0 / jnp.sqrt(HID_F)
    w1 = jax.random.uniform(k_w1, (HID_F, IN_F), jnp.float32, -bound1, bound1)
    b1 = jax.random.uniform(k_b1, (HID_F,), jnp.float32, -bound1, bound1)
    w2 = jax.random.uniform(k_w2, (OUT_F, HID_F), jnp.float32, -bound2, bound2)
    b2 = jax.random.uniform(k_b2, (OUT_F,), jnp.float32, -bound2, bound2)

    x = jax.random.normal(k_x, (B, IN_F), jnp.float32)

    def ref_forward(xx):
        return jnp.maximum(xx @ w1.T + b1, 0.0) @ w2.T + b2

    # --- f32 MXU inputs: exact (tight tolerance) ---
    params_f32 = prepare_params(w1, b1, w2, b2, param_dtype=jnp.float32)
    out_f32 = jax.block_until_ready(toy_mp_forward(x, *params_f32))
    assert out_f32.shape == (B, OUT_F)
    assert jnp.allclose(out_f32, ref_forward(x), atol=1e-5, rtol=1e-5)

    # --- bf16 MXU inputs (default path), f32 accumulation: loose tolerance ---
    params_bf16 = prepare_params(w1, b1, w2, b2)  # default bf16
    out_bf16 = jax.block_until_ready(toy_mp_forward(x, *params_bf16))
    assert out_bf16.shape == (B, OUT_F)
    assert jnp.allclose(out_bf16, ref_forward(x), atol=5e-2, rtol=5e-2)

    # --- multi-tile grid path (row padding + >=2 grid steps), still a small problem ---
    B2 = 600
    x2 = jax.random.normal(k_x2, (B2, IN_F), jnp.float32)
    out2 = jax.block_until_ready(toy_mp_forward(x2, *params_f32))
    assert out2.shape == (B2, OUT_F)
    assert jnp.allclose(out2, ref_forward(x2), atol=1e-5, rtol=1e-5)

    print("KERNEL_OK")
</pallas_src>

<mosaic_0001>
module attributes {stable_mosaic.version = 11 : i64} {
  func.func @toy_mp_kernel(%arg0: i32, %arg1: memref<8x16xf32, #tpu.memory_space<vmem>>, %arg2: memref<16x128xf32, #tpu.memory_space<vmem>>, %arg3: memref<1x128xf32, #tpu.memory_space<vmem>>, %arg4: memref<128x8xf32, #tpu.memory_space<vmem>>, %arg5: memref<1x8xf32, #tpu.memory_space<vmem>>, %arg6: memref<8x8xf32, #tpu.memory_space<vmem>>) attributes {dimension_semantics = [#tpu.dimension_semantics<parallel>], iteration_bounds = array<i64: 1>, scalar_prefetch = 0 : i64, scratch_operands = 0 : i64, tpu.core_type = #tpu.core_type<tc>, window_params = [{transform_indices = @transform_0, window_bounds = array<i64: 8, 16>}, {pipeline_mode = #tpu.pipeline_mode<synchronous>, transform_indices = @transform_1, window_bounds = array<i64: 16, 128>}, {pipeline_mode = #tpu.pipeline_mode<synchronous>, transform_indices = @transform_2, window_bounds = array<i64: 1, 128>}, {pipeline_mode = #tpu.pipeline_mode<synchronous>, transform_indices = @transform_3, window_bounds = array<i64: 128, 8>}, {pipeline_mode = #tpu.pipeline_mode<synchronous>, transform_indices = @transform_4, window_bounds = array<i64: 1, 8>}, {transform_indices = @transform_5, window_bounds = array<i64: 8, 8>}]} {
    %c0 = arith.constant 0 : index
    %c0_0 = arith.constant 0 : index
    %0 = vector.load %arg1[%c0, %c0_0] : memref<8x16xf32, #tpu.memory_space<vmem>>, vector<8x16xf32>
    %c0_1 = arith.constant 0 : index
    %c0_2 = arith.constant 0 : index
    %1 = vector.load %arg2[%c0_1, %c0_2] : memref<16x128xf32, #tpu.memory_space<vmem>>, vector<16x128xf32>
    %cst = arith.constant dense<0.000000e+00> : vector<8x128xf32>
    %2 = tpu.matmul %0, %1, %cst {dimension_numbers = #tpu.dot_dimension_numbers<[1], [0], [0], [1], [0, 0, 1, 1], [], []>} : vector<8x16xf32>, vector<16x128xf32>, vector<8x128xf32> -> vector<8x128xf32>
    %c0_3 = arith.constant 0 : index
    %c0_4 = arith.constant 0 : index
    %3 = vector.load %arg3[%c0_3, %c0_4] : memref<1x128xf32, #tpu.memory_space<vmem>>, vector<1x128xf32>
    %4 = vector.broadcast %3 : vector<1x128xf32> to vector<8x128xf32>
    %5 = arith.addf %2, %4 : vector<8x128xf32>
    %cst_5 = arith.constant 0.000000e+00 : f32
    %6 = vector.broadcast %cst_5 : f32 to vector<8x128xf32>
    %7 = arith.maximumf %5, %6 : vector<8x128xf32>
    %c0_6 = arith.constant 0 : index
    %c0_7 = arith.constant 0 : index
    %8 = vector.load %arg4[%c0_6, %c0_7] : memref<128x8xf32, #tpu.memory_space<vmem>>, vector<128x8xf32>
    %cst_8 = arith.constant dense<0.000000e+00> : vector<8x8xf32>
    %9 = tpu.matmul %7, %8, %cst_8 {dimension_numbers = #tpu.dot_dimension_numbers<[1], [0], [0], [1], [0, 0, 1, 1], [], []>} : vector<8x128xf32>, vector<128x8xf32>, vector<8x8xf32> -> vector<8x8xf32>
    %c0_9 = arith.constant 0 : index
    %c0_10 = arith.constant 0 : index
    %10 = vector.load %arg5[%c0_9, %c0_10] : memref<1x8xf32, #tpu.memory_space<vmem>>, vector<1x8xf32>
    %11 = vector.broadcast %10 : vector<1x8xf32> to vector<8x8xf32>
    %12 = arith.addf %9, %11 : vector<8x8xf32>
    %c0_11 = arith.constant 0 : index
    %c0_12 = arith.constant 0 : index
    %13 = vector.load %arg6[%c0_11, %c0_12] : memref<8x8xf32, #tpu.memory_space<vmem>>, vector<8x8xf32>
    tpu.vector_store %arg6[%c0_11, %c0_12], %12 {strides = array<i32>} : memref<8x8xf32, #tpu.memory_space<vmem>>, vector<8x8xf32>,
    return
  }
  func.func @transform_0(%arg0: i32) -> (i32, i32) {
    %c0_i32 = arith.constant 0 : i32
    %c0_i32_0 = arith.constant 0 : i32
    return %arg0, %c0_i32 : i32, i32
  }
  func.func @transform_1(%arg0: i32) -> (i32, i32) {
    %c0_i32 = arith.constant 0 : i32
    %c0_i32_0 = arith.constant 0 : i32
    %c0_i32_1 = arith.constant 0 : i32
    return %c0_i32, %c0_i32_0 : i32, i32
  }
  func.func @transform_2(%arg0: i32) -> (i32, i32) {
    %c0_i32 = arith.constant 0 : i32
    %c0_i32_0 = arith.constant 0 : i32
    %c0_i32_1 = arith.constant 0 : i32
    return %c0_i32, %c0_i32_0 : i32, i32
  }
  func.func @transform_3(%arg0: i32) -> (i32, i32) {
    %c0_i32 = arith.constant 0 : i32
    %c0_i32_0 = arith.constant 0 : i32
    %c0_i32_1 = arith.constant 0 : i32
    return %c0_i32, %c0_i32_0 : i32, i32
  }
  func.func @transform_4(%arg0: i32) -> (i32, i32) {
    %c0_i32 = arith.constant 0 : i32
    %c0_i32_0 = arith.constant 0 : i32
    %c0_i32_1 = arith.constant 0 : i32
    return %c0_i32, %c0_i32_0 : i32, i32
  }
  func.func @transform_5(%arg0: i32) -> (i32, i32) {
    %c0_i32 = arith.constant 0 : i32
    %c0_i32_0 = arith.constant 0 : i32
    return %arg0, %c0_i32 : i32, i32
  }
}

</mosaic_0001>

<llo_original>
// kernel: toy_mp_forward.1
$region0: #{toy_mp_forward.1}
  #allocation0 [shape = 'u32[]', space=smem, size = 0x4, offset = 0x4, fixed_abs, tag = 'smem constant byte address 0x4 - core index']
  #allocation1 [shape = 'u32[72,128]{1,0:T(1,128)}', space=vmem, size = 0x9000, scoped, tag = 'internal scratch']
  %s0 = inlined_call_operand.vmem [shape: f32[8,16], index: 0, kind: input, shape index: {}]
  %s1 = inlined_call_operand.vmem [shape: f32[16,128], index: 1, kind: input, shape index: {}]
  %s2 = inlined_call_operand.vmem [shape: f32[1,128], index: 2, kind: input, shape index: {}]
  %s3 = inlined_call_operand.vmem [shape: f32[128,8], index: 3, kind: input, shape index: {}]
  %s4 = inlined_call_operand.vmem [shape: f32[1,8], index: 4, kind: input, shape index: {}]
  %s5 = inlined_call_operand.hbm [shape: f32[8,8], index: 5, kind: output, shape index: {}]
  %s6 = sld [smem:[#allocation0]]
  $region30: #{toy_mp_forward.1} parent=0
    _
  %s8 = ssub.s32 1, %s6
  %s9 = scalar_select 0, %s8, %s6
  $region1: #{toy_mp_forward.1} parent=0
    #allocation2 [shape = 'u8[4096]{0}', space=vmem, size = 0x1000, scoped, tag = 'output window, operand 0, single buffered']
    #allocation3 [shape = 's32[1]{0}', space=sflag, size = 0x4, scoped, tag = 'scoped memory for toy_mp_forward.1']
    %10 = vsyncpa [#allocation3], 0
    // Predicated region
    $region2: #{toy_mp_forward.1} parent=1 // pred_check
      _
    $region3: #{toy_mp_forward.1} parent=1 // pred_check_branch
      %12 = sbr.rel (0) target = $region5
    $region4: #{toy_mp_forward.1} parent=1 // pred_region
      _
    $region5: #{toy_mp_forward.1} parent=1 // pred_fallthru
      _
    // Predicated region
    $region6: #{toy_mp_forward.1} parent=1 // pred_check
      _
    $region7: #{toy_mp_forward.1} parent=1 // pred_check_branch
      %14 = sbr.rel (0) target = $region9
    $region8: #{toy_mp_forward.1} parent=1 // pred_region
      _
    $region9: #{toy_mp_forward.1} parent=1 // pred_fallthru
      _
    // Predicated region
    $region10: #{toy_mp_forward.1} parent=1 // pred_check
      _
    $region11: #{toy_mp_forward.1} parent=1 // pred_check_branch
      %16 = sbr.rel (0) target = $region13
    $region12: #{toy_mp_forward.1} parent=1 // pred_region
      _
    $region13: #{toy_mp_forward.1} parent=1 // pred_fallthru
      _
    // Predicated region
    $region14: #{toy_mp_forward.1} parent=1 // pred_check
      _
    $region15: #{toy_mp_forward.1} parent=1 // pred_check_branch
      %18 = sbr.rel (0) target = $region17
    $region16: #{toy_mp_forward.1} parent=1 // pred_region
      _
    $region17: #{toy_mp_forward.1} parent=1 // pred_fallthru
      _
    // Predicated region
    $region18: #{toy_mp_forward.1} parent=1 // pred_check
      _
    $region19: #{toy_mp_forward.1} parent=1 // pred_check_branch
      %20 = sbr.rel (0) target = $region21
    $region20: #{toy_mp_forward.1} parent=1 // pred_region
      _
    $region21: #{toy_mp_forward.1} parent=1 // pred_fallthru
      _
    %v21 = vld [vmem:[%s0] sm:$0xff]
    %v22 = vld [vmem:[%s1] sm:$0xff]
    %v23 = vld [vmem:[%s1 + $0x8] sm:$0xff]
    %v24 = vld [vmem:[%s2] sm:$0x1]
    %v26 = vperm.slane %v24, 0
    %vm28 = vcmask 130048
    %v30 = vsel %vm28, %v21, 0
    %32 = vmatpush.msra.mxu0 0.0
    %33 = vmatpush.msra.mxu0 0.0
    %34 = vmatpush.msra.mxu0 0.0
    %35 = vmatpush.msra.mxu0 0.0
    %36 = vmatpush.msra.mxu0 0.0
    %37 = vmatpush.msra.mxu0 0.0
    %38 = vmatpush.msra.mxu0 0.0
    %39 = vmatpush.msra.mxu0 0.0
    %40 = vmatpush.msra.mxu0 0.0
    %41 = vmatpush.msra.mxu0 0.0
    %42 = vmatpush.msra.mxu0 0.0
    %43 = vmatpush.msra.mxu0 0.0
    %44 = vmatpush.msra.mxu0 0.0
    %45 = vmatpush.msra.mxu0 0.0
    %46 = vmatpush.msra.mxu0 %v23
    %47 = vmatpush.msra.mxu0 %v22
    %48 = vmatmul.f32.gmra.mxu0 %v30
    %v49 = vpop.f32.mrf.mxu0
    %v50 = vadd.f32 %v26, %v49
    %51 = vdwg.mxu0
    %v52 = vmax.f32 %v50, 0.0
    %v53 = vld [vmem:[%s3] sm:$0xff]
    %v54 = vld [vmem:[%s3 + $0x8] sm:$0xff]
    %v55 = vld [vmem:[%s3 + $0x10] sm:$0xff]
    %v56 = vld [vmem:[%s3 + $0x18] sm:$0xff]
    %v57 = vld [vmem:[%s3 + $0x20] sm:$0xff]
    %v58 = vld [vmem:[%s3 + $0x28] sm:$0xff]
    %v59 = vld [vmem:[%s3 + $0x30] sm:$0xff]
    %v60 = vld [vmem:[%s3 + $0x38] sm:$0xff]
    %v61 = vld [vmem:[%s3 + $0x40] sm:$0xff]
    %v62 = vld [vmem:[%s3 + $0x48] sm:$0xff]
    %v63 = vld [vmem:[%s3 + $0x50] sm:$0xff]
    %v64 = vld [vmem:[%s3 + $0x58] sm:$0xff]
    %v65 = vld [vmem:[%s3 + $0x60] sm:$0xff]
    %v66 = vld [vmem:[%s3 + $0x68] sm:$0xff]
    %v67 = vld [vmem:[%s3 + $0x70] sm:$0xff]
    %v68 = vld [vmem:[%s3 + $0x78] sm:$0xff]
    %v69 = vld [vmem:[%s4] sm:$0x1]
    %v71 = vperm.slane %v69, 0
    %73 = vmatpush.msra.mxu0 %v68
    %74 = vmatpush.msra.mxu0 %v67
    %75 = vmatpush.msra.mxu0 %v66
    %76 = vmatpush.msra.mxu0 %v65
    %77 = vmatpush.msra.mxu0 %v64
    %78 = vmatpush.msra.mxu0 %v63
    %79 = vmatpush.msra.mxu0 %v62
    %80 = vmatpush.msra.mxu0 %v61
    %81 = vmatpush.msra.mxu0 %v60
    %82 = vmatpush.msra.mxu0 %v59
    %83 = vmatpush.msra.mxu0 %v58
    %84 = vmatpush.msra.mxu0 %v57
    %85 = vmatpush.msra.mxu0 %v56
    %86 = vmatpush.msra.mxu0 %v55
    %87 = vmatpush.msra.mxu0 %v54
    %88 = vmatpush.msra.mxu0 %v53
    %89 = vmatmul.f32.gmra.mxu0 %v52
    %v90 = vpop.f32.mrf.mxu0
    %v91 = vadd.f32 %v71, %v90
    %92 = vdwg.mxu0
    %vm93 = vcmask 64512
    %94 = vst.msk [vmem:[#allocation2] sm:$0xff] %vm93, %v91
    // Predicated region
    $region22: #{toy_mp_forward.1} parent=1 // pred_check
      _
    $region23: #{toy_mp_forward.1} parent=1 // pred_check_branch
      %96 = sbr.rel (0) target = $region25
    $region24: #{toy_mp_forward.1} parent=1 // pred_region
      %98 = vsyncadd [#allocation3], 0
      %s100 = sshll.u32 [#allocation2], 4
      %s101 = int_to_ptr.vmem [resolvable:$true] %s100
      %s102 = sshll.u32 %s5, 4
      %s103 = int_to_ptr.hbm [resolvable:$true] %s102
      %105 = dma.vmem_to_hbm [thread:$0]  %s101, 128, %s103, [#allocation3]
    $region25: #{toy_mp_forward.1} parent=1 // pred_fallthru
      _
    // Predicated region
    $region26: #{toy_mp_forward.1} parent=1 // pred_check
      _
    $region27: #{toy_mp_forward.1} parent=1 // pred_check_branch
      %107 = sbr.rel (0) target = $region29
    $region28: #{toy_mp_forward.1} parent=1 // pred_region
      %109 = dma.done [#allocation3], 128
    $region29: #{toy_mp_forward.1} parent=1 // pred_fallthru
      _
    %110 = vsyncpa [#allocation3], 1

</llo_original>
